<compile_context>
chip_gen: v6e
topology: v6e:2x2x1
jax: 0.10.0
libtpu: 0.0.40
codegen_flags: <defaults>
</compile_context>

<pallas_src>
import functools

import jax
import jax.numpy as jnp
from jax.experimental import pallas as pl
from jax.experimental.pallas import tpu as pltpu


def _final_layer_kernel(x_ref, mod_ref, wl_ref, bl_ref, o_ref, *, eps, out_dim):
    # x_ref: (1, tT, H)   mod_ref: (1, 2, H) = [shift; 1+scale]
    # wl_ref: (H, N_pad)  bl_ref: (1, N_pad)  o_ref: (1, tT, O)
    x = x_ref[0].astype(jnp.float32)                          # (tT, H)
    h = x.shape[-1]

    # ---- LayerNorm (no affine), single pass over the tile ----
    s1 = jnp.sum(x, axis=-1, keepdims=True)                   # (tT, 1)
    s2 = jnp.sum(x * x, axis=-1, keepdims=True)               # (tT, 1)
    mean = s1 * (1.0 / h)
    var = jnp.maximum(s2 * (1.0 / h) - mean * mean, 0.0)      # clamp cancellation
    xn = (x - mean) * jax.lax.rsqrt(var + eps)

    # ---- modulate: x * (1 + scale) + shift  (scale already pre-offset) ----
    m = mod_ref[0].astype(jnp.float32)                        # (2, H)
    shift = m[0:1, :]                                         # (1, H)
    scale1 = m[1:2, :]                                        # (1, H) = 1 + scale
    xm = xn * scale1 + shift                                  # (tT, H)

    # ---- final linear: H -> N_pad on the MXU, f32 accumulation ----
    y = jnp.dot(xm.astype(wl_ref.dtype), wl_ref[...],
                preferred_element_type=jnp.float32)
    y = y + bl_ref[...].astype(jnp.float32)                   # (tT, N_pad)
    o_ref[0] = y[:, :out_dim].astype(o_ref.dtype)             # true-width store


def final_layer_forward(x, c, w_mod, b_mod, w_lin, b_lin,
                        *, block_t=1024, eps=1e-6, compute_dtype=jnp.bfloat16):
    """x: (B, T, H), c: (B, H).  Returns (B, T, O), O = w_lin.shape[1].

    compute_dtype: dtype of the final-linear matmul operands (weights + xm
    cast).  bf16 (default) gives the full-rate MXU path on all generations;
    accumulation is always f32.  For the biggest HBM win, feed x itself in
    bf16 (produced upstream) -- the kernel upcasts to f32 for the LayerNorm.
    """
    B, T, H = x.shape
    O = w_lin.shape[1]
    out_dtype = x.dtype

    # ---- Hoisted adaLN branch (tiny M=1 matmul, plain XLA) ----
    c32 = c.astype(jnp.float32)
    silu = c32 * jax.nn.sigmoid(c32)
    mod = silu @ w_mod.astype(jnp.float32) + b_mod.astype(jnp.float32)   # (B, 2H)
    # Pack [shift ; 1+scale] -> (B, 2, H); (1,2,H) blocks are tiling-legal
    # and the +1 is precomputed once here instead of per (tT, H) tile.
    mod_packed = jnp.stack([mod[:, :H], 1.0 + mod[:, H:]], axis=1)       # (B,2,H) f32

    # ---- Weight: cast to MXU dtype, pad N to a lane multiple ----
    N_pad = ((O + 127) // 128) * 128
    w = w_lin.astype(compute_dtype)
    b = b_lin.astype(jnp.float32)
    if N_pad != O:
        w = jnp.pad(w, ((0, 0), (0, N_pad - O)))
        b = jnp.pad(b, ((0, N_pad - O),))
    b2 = b.reshape(1, N_pad)

    # ---- Sequence tiling: large slab to amortise per-step overhead, but
    #      keep a few balanced parallel chunks for megacore / dual-TC. ----
    tT = T if T <= block_t else block_t              # block_t is a multiple of 8
    while B * pl.cdiv(T, tT) < 4 and tT > 8 and tT % 16 == 0:
        tT //= 2
    grid = (B, pl.cdiv(T, tT))

    x_bytes = x.dtype.itemsize
    o_bytes = jnp.dtype(out_dtype).itemsize
    w_bytes = jnp.dtype(compute_dtype).itemsize

    cost = pl.CostEstimate(
        flops=2 * B * T * H * N_pad,
        transcendentals=B * T,                                     # rsqrt per row
        bytes_accessed=(B * T * H * x_bytes + B * T * O * o_bytes
                        + H * N_pad * w_bytes + B * 2 * H * 4 + N_pad * 4),
    )

    # VMEM budget: double-buffered x tile + out tile, resident weight/bias/mod,
    # plus f32 temporaries; generous headroom but capped for v7x (64 MiB phys).
    vmem_est = (2 * tT * H * x_bytes + 2 * tT * O * o_bytes
                + H * N_pad * w_bytes + 2 * 2 * H * 4 + N_pad * 4
                + 4 * tT * max(H, N_pad) * 4)
    vmem_limit = int(min(64 << 20, max(32 << 20, 2 * vmem_est)))

    out = pl.pallas_call(
        functools.partial(_final_layer_kernel, eps=eps, out_dim=O),
        out_shape=jax.ShapeDtypeStruct((B, T, O), out_dtype),
        grid_spec=pltpu.PrefetchScalarGridSpec(
            num_scalar_prefetch=0,
            grid=grid,
            in_specs=[
                pl.BlockSpec((1, tT, H), lambda bi, ti: (bi, ti, 0)),   # x tile
                pl.BlockSpec((1, 2, H), lambda bi, ti: (bi, 0, 0)),     # shift/1+scale
                pl.BlockSpec((H, N_pad), lambda bi, ti: (0, 0)),        # W_lin (shared)
                pl.BlockSpec((1, N_pad), lambda bi, ti: (0, 0)),        # b_lin
            ],
            out_specs=pl.BlockSpec((1, tT, O), lambda bi, ti: (bi, ti, 0)),
        ),
        compiler_params=pltpu.CompilerParams(
            dimension_semantics=("parallel", "parallel"),
            vmem_limit_bytes=vmem_limit),
        cost_estimate=cost,
    )(x, mod_packed, w, b2)

    return out


def final_layer_reference(x, c, w_mod, b_mod, w_lin, b_lin):
    """Pure-JAX reference matching the PyTorch forward exactly (f32)."""
    H = x.shape[-1]
    silu = c * jax.nn.sigmoid(c)
    mod = silu @ w_mod + b_mod
    shift, scale = mod[:, :H], mod[:, H:]
    mean = jnp.mean(x, axis=-1, keepdims=True)
    var = jnp.mean((x - mean) ** 2, axis=-1, keepdims=True)
    xn = (x - mean) * jax.lax.rsqrt(var + 1e-6)
    xm = xn * (1 + scale[:, None, :]) + shift[:, None, :]
    return xm @ w_lin + b_lin


if __name__ == "__main__":
    # Small shapes consistent with the module.
    B, T = 2, 8
    hidden_size = 32
    patch_size = 2
    out_channels = 4
    O = patch_size * patch_size * out_channels   # 16

    key = jax.random.PRNGKey(0)
    kx, kc, k1, k2, k3, k4 = jax.random.split(key, 6)

    x = jax.random.normal(kx, (B, T, hidden_size), dtype=jnp.float32)
    c = jax.random.normal(kc, (B, hidden_size), dtype=jnp.float32)

    # Parameters stored transposed (so the kernel does x @ W directly).
    w_mod = 0.02 * jax.random.normal(k1, (hidden_size, 2 * hidden_size), dtype=jnp.float32)
    b_mod = 0.01 * jax.random.normal(k2, (2 * hidden_size,), dtype=jnp.float32)
    w_lin = 0.02 * jax.random.normal(k3, (hidden_size, O), dtype=jnp.float32)
    b_lin = 0.01 * jax.random.normal(k4, (O,), dtype=jnp.float32)

    ref = final_layer_reference(x, c, w_mod, b_mod, w_lin, b_lin)

    # 1) Exact-precision path (f32 matmul) -- tight tolerance check.
    out_f32 = final_layer_forward(x, c, w_mod, b_mod, w_lin, b_lin,
                                  compute_dtype=jnp.float32)
    jax.block_until_ready(out_f32)
    assert out_f32.shape == (B, T, O), out_f32.shape
    assert jnp.allclose(out_f32, ref, atol=1e-5, rtol=1e-5), \
        float(jnp.max(jnp.abs(out_f32 - ref)))

    # 2) Production path: bf16 x stream + bf16 MXU weights (halves the
    #    dominant HBM read, full-rate MXU) -- bf16-level tolerance.
    out_bf16 = final_layer_forward(x.astype(jnp.bfloat16), c, w_mod, b_mod,
                                   w_lin, b_lin, compute_dtype=jnp.bfloat16)
    jax.block_until_ready(out_bf16)
    assert out_bf16.shape == (B, T, O), out_bf16.shape
    assert jnp.allclose(out_bf16.astype(jnp.float32), ref, atol=3e-2, rtol=3e-2), \
        float(jnp.max(jnp.abs(out_bf16.astype(jnp.float32) - ref)))

    print("KERNEL_OK")
</pallas_src>

<mosaic_0001>
module attributes {stable_mosaic.version = 11 : i64} {
  func.func @_final_layer_kernel(%arg0: i32, %arg1: i32, %arg2: memref<1x8x32xf32, #tpu.memory_space<vmem>>, %arg3: memref<1x2x32xf32, #tpu.memory_space<vmem>>, %arg4: memref<32x128xf32, #tpu.memory_space<vmem>>, %arg5: memref<1x128xf32, #tpu.memory_space<vmem>>, %arg6: memref<1x8x16xf32, #tpu.memory_space<vmem>>) attributes {dimension_semantics = [#tpu.dimension_semantics<parallel>, #tpu.dimension_semantics<parallel>], iteration_bounds = array<i64: 2, 1>, scalar_prefetch = 0 : i64, scratch_operands = 0 : i64, tpu.core_type = #tpu.core_type<tc>, window_params = [{transform_indices = @transform_0, window_bounds = array<i64: 1, 8, 32>}, {transform_indices = @transform_1, window_bounds = array<i64: 1, 2, 32>}, {pipeline_mode = #tpu.pipeline_mode<synchronous>, transform_indices = @transform_2, window_bounds = array<i64: 32, 128>}, {pipeline_mode = #tpu.pipeline_mode<synchronous>, transform_indices = @transform_3, window_bounds = array<i64: 1, 128>}, {transform_indices = @transform_4, window_bounds = array<i64: 1, 8, 16>}]} {
    %c0 = arith.constant 0 : index
    %c0_0 = arith.constant 0 : index
    %c0_1 = arith.constant 0 : index
    %0 = vector.load %arg2[%c0, %c0_0, %c0_1] : memref<1x8x32xf32, #tpu.memory_space<vmem>>, vector<1x8x32xf32>
    %1 = vector.shape_cast %0 : vector<1x8x32xf32> to vector<8x32xf32>
    %cst = arith.constant dense<0.000000e+00> : vector<8xf32>
    %2 = vector.multi_reduction <add>, %1, %cst [1] : vector<8x32xf32> to vector<8xf32>
    %3 = vector.shape_cast %2 : vector<8xf32> to vector<8x1xf32>
    %4 = arith.mulf %1, %1 : vector<8x32xf32>
    %cst_2 = arith.constant dense<0.000000e+00> : vector<8xf32>
    %5 = vector.multi_reduction <add>, %4, %cst_2 [1] : vector<8x32xf32> to vector<8xf32>
    %6 = vector.shape_cast %5 : vector<8xf32> to vector<8x1xf32>
    %cst_3 = arith.constant 3.125000e-02 : f32
    %7 = vector.broadcast %cst_3 : f32 to vector<8x1xf32>
    %8 = arith.mulf %3, %7 : vector<8x1xf32>
    %cst_4 = arith.constant 3.125000e-02 : f32
    %9 = vector.broadcast %cst_4 : f32 to vector<8x1xf32>
    %10 = arith.mulf %6, %9 : vector<8x1xf32>
    %11 = arith.mulf %8, %8 : vector<8x1xf32>
    %12 = arith.subf %10, %11 : vector<8x1xf32>
    %cst_5 = arith.constant 0.000000e+00 : f32
    %13 = vector.broadcast %cst_5 : f32 to vector<8x1xf32>
    %14 = arith.maximumf %12, %13 : vector<8x1xf32>
    %15 = vector.broadcast %8 : vector<8x1xf32> to vector<8x32xf32>
    %16 = arith.subf %1, %15 : vector<8x32xf32>
    %cst_6 = arith.constant 9.99999997E-7 : f32
    %17 = vector.broadcast %cst_6 : f32 to vector<8x1xf32>
    %18 = arith.addf %14, %17 : vector<8x1xf32>
    %19 = math.rsqrt %18 : vector<8x1xf32>
    %20 = vector.broadcast %19 : vector<8x1xf32> to vector<8x32xf32>
    %21 = arith.mulf %16, %20 : vector<8x32xf32>
    %c0_7 = arith.constant 0 : index
    %c0_8 = arith.constant 0 : index
    %c0_9 = arith.constant 0 : index
    %22 = vector.load %arg3[%c0_7, %c0_8, %c0_9] : memref<1x2x32xf32, #tpu.memory_space<vmem>>, vector<1x2x32xf32>
    %23 = vector.shape_cast %22 : vector<1x2x32xf32> to vector<2x32xf32>
    %24 = vector.extract_strided_slice %23 {offsets = [0, 0], sizes = [1, 32], strides = [1, 1]} : vector<2x32xf32> to vector<1x32xf32>
    %25 = vector.extract_strided_slice %23 {offsets = [1, 0], sizes = [1, 32], strides = [1, 1]} : vector<2x32xf32> to vector<1x32xf32>
    %26 = vector.broadcast %25 : vector<1x32xf32> to vector<8x32xf32>
    %27 = arith.mulf %21, %26 : vector<8x32xf32>
    %28 = vector.broadcast %24 : vector<1x32xf32> to vector<8x32xf32>
    %29 = arith.addf %27, %28 : vector<8x32xf32>
    %c0_10 = arith.constant 0 : index
    %c0_11 = arith.constant 0 : index
    %30 = vector.load %arg4[%c0_10, %c0_11] : memref<32x128xf32, #tpu.memory_space<vmem>>, vector<32x128xf32>
    %cst_12 = arith.constant dense<0.000000e+00> : vector<8x128xf32>
    %31 = tpu.matmul %29, %30, %cst_12 {dimension_numbers = #tpu.dot_dimension_numbers<[1], [0], [0], [1], [0, 0, 1, 1], [], []>} : vector<8x32xf32>, vector<32x128xf32>, vector<8x128xf32> -> vector<8x128xf32>
    %c0_13 = arith.constant 0 : index
    %c0_14 = arith.constant 0 : index
    %32 = vector.load %arg5[%c0_13, %c0_14] : memref<1x128xf32, #tpu.memory_space<vmem>>, vector<1x128xf32>
    %33 = vector.broadcast %32 : vector<1x128xf32> to vector<8x128xf32>
    %34 = arith.addf %31, %33 : vector<8x128xf32>
    %35 = vector.extract_strided_slice %34 {offsets = [0, 0], sizes = [8, 16], strides = [1, 1]} : vector<8x128xf32> to vector<8x16xf32>
    %c0_15 = arith.constant 0 : index
    %c0_16 = arith.constant 0 : index
    %c0_17 = arith.constant 0 : index
    %36 = vector.load %arg6[%c0_15, %c0_16, %c0_17] : memref<1x8x16xf32, #tpu.memory_space<vmem>>, vector<1x8x16xf32>
    %37 = vector.shape_cast %36 : vector<1x8x16xf32> to vector<8x16xf32>
    %38 = vector.shape_cast %35 : vector<8x16xf32> to vector<1x8x16xf32>
    tpu.vector_store %arg6[%c0_15, %c0_16, %c0_17], %38 {strides = array<i32>} : memref<1x8x16xf32, #tpu.memory_space<vmem>>, vector<1x8x16xf32>,
    return
  }
  func.func @transform_0(%arg0: i32, %arg1: i32) -> (i32, i32, i32) {
    %c0_i32 = arith.constant 0 : i32
    %c0_i32_0 = arith.constant 0 : i32
    return %arg0, %arg1, %c0_i32 : i32, i32, i32
  }
  func.func @transform_1(%arg0: i32, %arg1: i32) -> (i32, i32, i32) {
    %c0_i32 = arith.constant 0 : i32
    %c0_i32_0 = arith.constant 0 : i32
    %c0_i32_1 = arith.constant 0 : i32
    return %arg0, %c0_i32, %c0_i32_0 : i32, i32, i32
  }
  func.func @transform_2(%arg0: i32, %arg1: i32) -> (i32, i32) {
    %c0_i32 = arith.constant 0 : i32
    %c0_i32_0 = arith.constant 0 : i32
    %c0_i32_1 = arith.constant 0 : i32
    return %c0_i32, %c0_i32_0 : i32, i32
  }
  func.func @transform_3(%arg0: i32, %arg1: i32) -> (i32, i32) {
    %c0_i32 = arith.constant 0 : i32
    %c0_i32_0 = arith.constant 0 : i32
    %c0_i32_1 = arith.constant 0 : i32
    return %c0_i32, %c0_i32_0 : i32, i32
  }
  func.func @transform_4(%arg0: i32, %arg1: i32) -> (i32, i32, i32) {
    %c0_i32 = arith.constant 0 : i32
    %c0_i32_0 = arith.constant 0 : i32
    return %arg0, %arg1, %c0_i32 : i32, i32, i32
  }
}

</mosaic_0001>

<llo_original>
// kernel: tpu_custom_call.1
$region0: #{tpu_custom_call.1}
  #allocation0 [shape = 'u32[]', space=smem, size = 0x4, offset = 0x4, fixed_abs, tag = 'smem constant byte address 0x4 - core index']
  #allocation1 [shape = 'u32[144,128]{1,0:T(1,128)}', space=vmem, size = 0x12000, scoped, tag = 'internal scratch']
  %s0 = inlined_call_operand.hbm [shape: f32[2,8,32], index: 0, kind: input, shape index: {}]
  %s1 = inlined_call_operand.hbm [shape: f32[2,2,32], index: 1, kind: input, shape index: {}]
  %s2 = inlined_call_operand.hbm [shape: f32[32,128], index: 2, kind: input, shape index: {}]
  %s3 = inlined_call_operand.vmem [shape: f32[1,128], index: 3, kind: input, shape index: {}]
  %s4 = inlined_call_operand.hbm [shape: f32[2,8,16], index: 4, kind: output, shape index: {}]
  %s5 = sld [smem:[#allocation0]]
  $region61: #{tpu_custom_call.1} parent=0
    _
  %s7 = ssub.s32 1, %s5
  %s8 = scalar_select 0, %s7, %s5
  $region1: #{tpu_custom_call.1} parent=0
    #allocation2 [shape = 'u8[8192]{0}', space=vmem, size = 0x2000, scoped, tag = 'input window, operand 0']
    #allocation3 [shape = 's32[2]{0}', space=sflag, size = 0x8, scoped, tag = 'scoped memory for tpu_custom_call.1']
    #allocation4 [shape = 's32[2]{0}', space=sflag, size = 0x8, scoped, tag = 'scoped memory for tpu_custom_call.1']
    #allocation5 [shape = 'u8[2048]{0}', space=vmem, size = 0x800, scoped, tag = 'input window, operand 1']
    #allocation6 [shape = 's32[2]{0}', space=sflag, size = 0x8, scoped, tag = 'scoped memory for tpu_custom_call.1']
    #allocation7 [shape = 'u8[16384]{0}', space=vmem, size = 0x4000, scoped, tag = 'input window, operand 2, single buffered']
    #allocation8 [shape = 'u8[8192]{0}', space=vmem, size = 0x2000, scoped, tag = 'output window, operand 0']
    %9 = vsyncpa [#allocation3], 0
    %s10 = scalar_lea.sflag [#allocation3], 1
    %11 = vsyncpa %s10, 0
    %12 = vsyncpa [#allocation6], 0
    %s13 = scalar_lea.sflag [#allocation6], 1
    %14 = vsyncpa %s13, 0
    %15 = vsyncpa [#allocation4], 0
    %s16 = scalar_lea.sflag [#allocation4], 1
    %17 = vsyncpa %s16, 0
    loop: start=0, step=1, limit=4
    $region2: #{tpu_custom_call.1} parent=1 // loop_pre_header
      _
    $region3: #{tpu_custom_call.1} parent=1 // loop_header
      %s19 = sphi 0, %s23
      %p20 = scmp.ge.s32.totalorder %s19, 4
      %s26 = sphi 0, %s38
      %s27 = sphi 0, %s34
      %s28 = sphi 0, %s26
      %s29 = sphi 0, %s27
      %s30 = sphi 0, %s28
      %s31 = sphi 0, %s29
      %s43 = sphi 0, %s45
      %s46 = sphi 0, %s43
      %s47 = sphi 0, %s46
      %s63 = sphi 0, %s47
      %s69 = sphi 0, %s71
      %s72 = sphi 0, %s69
      %s73 = sphi 0, %s72
      %s89 = sphi 0, %s73
      %s93 = sphi 0, %s93
      %s95 = sphi 0, %s93
      %s96 = sphi 0, %s95
      %s110 = sphi 0, %s96
      %s114 = sphi 0, %s114
      %s116 = sphi 0, %s114
      %s117 = sphi 0, %s116
      %s131 = sphi 0, %s117
      %s139 = sphi 0, %s141
      %s142 = sphi 0, %s139
      %s143 = sphi 0, %s142
      %s159 = sphi 0, %s143
    $region4: #{tpu_custom_call.1} parent=1 // loop_header_branch
      %22 = sbr.rel (%p20) target = $region8
    $region5: #{tpu_custom_call.1} parent=1 // loop_body
      %s24 = ssub.s32 %s19, 1
      %s25 = ssub.s32 %s19, 2
      %s32 = sadd.s32 1, %s27
      %p33 = scmp.ge.s32.totalorder %s32, 1
      %s34 = scalar_select %p33, 0, %s32
      %s35 = sadd.s32 1, %s26
      %s36 = scalar_select %p33, %s35, %s26
      %p37 = scmp.ge.s32.totalorder %s36, 2
      %s38 = scalar_select %p37, 0, %s36
      %s39 = ssub.s32 %s26, %s38
      %s40 = ssub.s32 %s27, %s34
      %s41 = sor.u32 %s39, %s40
      %p42 = scmp.eq.s32.totalorder %s41, 0
      %s44 = sadd.s32 %s43, 1
      %s45 = scalar_select %p42, %s43, %s44
      %p48 = pneg %p42
      %p49 = scmp.eq.s32.totalorder %s19, 1
      %p50 = por %p48, %p49
      %p51 = scmp.ne.s32.totalorder %s43, %s46
      %p52 = scmp.eq.s32.totalorder %s19, 0
      %p53 = por %p51, %p52
      %p54 = scmp.ne.s32.totalorder %s43, %s46
      %p55 = scmp.eq.s32.totalorder %s24, 1
      %p56 = por %p54, %p55
      %p57 = scmp.ne.s32.totalorder %s46, %s47
      %p58 = scmp.eq.s32.totalorder %s24, 0
      %p59 = por %p57, %p58
      %p60 = scmp.ne.s32.totalorder %s46, %s47
      %p61 = scmp.eq.s32.totalorder %s25, 1
      %p62 = por %p60, %p61
      %p64 = scmp.ne.s32.totalorder %s47, %s63
      %p65 = scmp.eq.s32.totalorder %s25, 0
      %p66 = por %p64, %p65
      %s67 = ssub.s32 %s26, %s38
      %p68 = scmp.eq.s32.totalorder %s67, 0
      %s70 = sadd.s32 %s69, 1
      %s71 = scalar_select %p68, %s69, %s70
      %p74 = pneg %p68
      %p75 = scmp.eq.s32.totalorder %s19, 1
      %p76 = por %p74, %p75
      %p77 = scmp.ne.s32.totalorder %s69, %s72
      %p78 = scmp.eq.s32.totalorder %s19, 0
      %p79 = por %p77, %p78
      %p80 = scmp.ne.s32.totalorder %s69, %s72
      %p81 = scmp.eq.s32.totalorder %s24, 1
      %p82 = por %p80, %p81
      %p83 = scmp.ne.s32.totalorder %s72, %s73
      %p84 = scmp.eq.s32.totalorder %s24, 0
      %p85 = por %p83, %p84
      %p86 = scmp.ne.s32.totalorder %s72, %s73
      %p87 = scmp.eq.s32.totalorder %s25, 1
      %p88 = por %p86, %p87
      %p90 = scmp.ne.s32.totalorder %s73, %s89
      %p91 = scmp.eq.s32.totalorder %s25, 0
      %p92 = por %p90, %p91
      %s94 = sadd.s32 %s93, 1
      %p97 = scmp.eq.s32.totalorder %s19, 1
      %p98 = scmp.ne.s32.totalorder %s93, %s95
      %p99 = scmp.eq.s32.totalorder %s19, 0
      %p100 = por %p98, %p99
      %p101 = scmp.ne.s32.totalorder %s93, %s95
      %p102 = scmp.eq.s32.totalorder %s24, 1
      %p103 = por %p101, %p102
      %p104 = scmp.ne.s32.totalorder %s95, %s96
      %p105 = scmp.eq.s32.totalorder %s24, 0
      %p106 = por %p104, %p105
      %p107 = scmp.ne.s32.totalorder %s95, %s96
      %p108 = scmp.eq.s32.totalorder %s25, 1
      %p109 = por %p107, %p108
      %p111 = scmp.ne.s32.totalorder %s96, %s110
      %p112 = scmp.eq.s32.totalorder %s25, 0
      %p113 = por %p111, %p112
      %s115 = sadd.s32 %s114, 1
      %p118 = scmp.eq.s32.totalorder %s19, 1
      %p119 = scmp.ne.s32.totalorder %s114, %s116
      %p120 = scmp.eq.s32.totalorder %s19, 0
      %p121 = por %p119, %p120
      %p122 = scmp.ne.s32.totalorder %s114, %s116
      %p123 = scmp.eq.s32.totalorder %s24, 1
      %p124 = por %p122, %p123
      %p125 = scmp.ne.s32.totalorder %s116, %s117
      %p126 = scmp.eq.s32.totalorder %s24, 0
      %p127 = por %p125, %p126
      %p128 = scmp.ne.s32.totalorder %s116, %s117
      %p129 = scmp.eq.s32.totalorder %s25, 1
      %p130 = por %p128, %p129
      %p132 = scmp.ne.s32.totalorder %s117, %s131
      %p133 = scmp.eq.s32.totalorder %s25, 0
      %p134 = por %p132, %p133
      %s135 = ssub.s32 %s26, %s38
      %s136 = ssub.s32 %s27, %s34
      %s137 = sor.u32 %s135, %s136
      %p138 = scmp.eq.s32.totalorder %s137, 0
      %s140 = sadd.s32 %s139, 1
      %s141 = scalar_select %p138, %s139, %s140
      %p144 = pneg %p138
      %p145 = scmp.eq.s32.totalorder %s19, 1
      %p146 = por %p144, %p145
      %p147 = scmp.ne.s32.totalorder %s139, %s142
      %p148 = scmp.eq.s32.totalorder %s19, 0
      %p149 = por %p147, %p148
      %p150 = scmp.ne.s32.totalorder %s139, %s142
      %p151 = scmp.eq.s32.totalorder %s24, 1
      %p152 = por %p150, %p151
      %p153 = scmp.ne.s32.totalorder %s142, %s143
      %p154 = scmp.eq.s32.totalorder %s24, 0
      %p155 = por %p153, %p154
      %p156 = scmp.ne.s32.totalorder %s142, %s143
      %p157 = scmp.eq.s32.totalorder %s25, 1
      %p158 = por %p156, %p157
      %p160 = scmp.ne.s32.totalorder %s143, %s159
      %p161 = scmp.eq.s32.totalorder %s25, 0
      %p162 = por %p160, %p161
      %p163 = scmp.le.s32.totalorder 1, %s19
      %p164 = scmp.lt.s32.totalorder %s19, 3
      %p165 = pnand %p163, %p164
      %p166 = pneg %p165
      // Predicated region
      $region9: #{tpu_custom_call.1} parent=5 // pred_check
        _
      $region10: #{tpu_custom_call.1} parent=5 // pred_check_branch
        %168 = sbr.rel (%p165) target = $region12
      $region11: #{tpu_custom_call.1} parent=5 // pred_region
        %s169 = ssub.s32 %s19, 1
        // Predicated region
        $region13: #{tpu_custom_call.1} parent=11 // pred_check
          %p170 = pneg %p106
        $region14: #{tpu_custom_call.1} parent=11 // pred_check_branch
          %172 = sbr.rel (%p170) target = $region16
        $region15: #{tpu_custom_call.1} parent=11 // pred_region
          %s174 = ssub.s32 512, 512
          %175 = vsyncadd [#allocation6], %s174
          %s176 = sshll.u32 [#allocation7], 4
          %s177 = int_to_ptr.vmem [resolvable:$true] %s176
          %182 = dma.hbm_to_vmem [thread:$0]  %s2, 512, %s177, [#allocation6], 128, 128, 8
        $region16: #{tpu_custom_call.1} parent=11 // pred_fallthru
          _
        // Predicated region
        $region17: #{tpu_custom_call.1} parent=11 // pred_check
          %p183 = pneg %p127
        $region18: #{tpu_custom_call.1} parent=11 // pred_check_branch
          %185 = sbr.rel (%p183) target = $region20
        $region19: #{tpu_custom_call.1} parent=11 // pred_region
          _
        $region20: #{tpu_custom_call.1} parent=11 // pred_fallthru
          _
      $region12: #{tpu_custom_call.1} parent=5 // pred_fallthru
        _
      %p186 = scmp.lt.s32.totalorder %s19, 2
      // Predicated region
      $region21: #{tpu_custom_call.1} parent=5 // pred_check
        %p187 = pneg %p186
      $region22: #{tpu_custom_call.1} parent=5 // pred_check_branch
        %189 = sbr.rel (%p187) target = $region24
      $region23: #{tpu_custom_call.1} parent=5 // pred_region
        // Predicated region
        $region25: #{tpu_custom_call.1} parent=23 // pred_check
          %p190 = pneg %p53
        $region26: #{tpu_custom_call.1} parent=23 // pred_check_branch
          %192 = sbr.rel (%p190) target = $region28
        $region27: #{tpu_custom_call.1} parent=23 // pred_region
          %s193 = sand.u32 %s43, 1
          %s194 = scalar_lea.sflag [#allocation3], %s193
          %s195 = sand.u32 %s43, 1
          %s196 = smul.addr %s195, 8
          %s197 = scalar_lea.vmem [#allocation2], %s196
          %s199 = ssub.s32 128, 128
          %200 = vsyncadd %s194, %s199
          %s201 = sadd.s32 %s27, %s26
          %s202 = smul.addr %s201, 128
          %s203 = scalar_lea.hbm %s0, %s202
          %s205 = sshll.u32 %s197, 4
          %s206 = int_to_ptr.vmem [resolvable:$true] %s205
          %208 = dma.hbm_to_vmem [thread:$0]  %s203, 128, %s206, %s194
        $region28: #{tpu_custom_call.1} parent=23 // pred_fallthru
          _
        // Predicated region
        $region29: #{tpu_custom_call.1} parent=23 // pred_check
          %p209 = pneg %p79
        $region30: #{tpu_custom_call.1} parent=23 // pred_check_branch
          %211 = sbr.rel (%p209) target = $region32
        $region31: #{tpu_custom_call.1} parent=23 // pred_region
          %s212 = sand.u32 %s19, 1
          %s213 = scalar_lea.sflag [#allocation6], %s212
          %s214 = sand.u32 %s69, 1
          %s215 = smul.addr %s214, 2
          %s216 = scalar_lea.vmem [#allocation5], %s215
          %s218 = ssub.s32 32, 32
          %219 = vsyncadd %s213, %s218
          %s220 = smul.addr %s26, 32
          %s221 = scalar_lea.hbm %s1, %s220
          %s223 = sshll.u32 %s216, 4
          %s224 = int_to_ptr.vmem [resolvable:$true] %s223
          %226 = dma.hbm_to_vmem [thread:$0]  %s221, 32, %s224, %s213
        $region32: #{tpu_custom_call.1} parent=23 // pred_fallthru
          _
      $region24: #{tpu_custom_call.1} parent=5 // pred_fallthru
        _
      %p227 = scmp.le.s32.totalorder 1, %s19
      %p228 = scmp.lt.s32.totalorder %s19, 3
      %p229 = pnand %p227, %p228
      %p230 = pneg %p229
      // Predicated region
      $region33: #{tpu_custom_call.1} parent=5 // pred_check
        _
      $region34: #{tpu_custom_call.1} parent=5 // pred_check_branch
        %232 = sbr.rel (%p229) target = $region36
      $region35: #{tpu_custom_call.1} parent=5 // pred_region
        %s233 = ssub.s32 %s19, 1
        %s234 = sand.u32 %s46, 1
        %s235 = scalar_lea.sflag [#allocation3], %s234
        %s236 = sand.u32 %s46, 1
        %s237 = smul.addr %s236, 8
        %s238 = scalar_lea.vmem [#allocation2], %s237
        // Predicated region
        $region37: #{tpu_custom_call.1} parent=35 // pred_check
          %p239 = pneg %p59
        $region38: #{tpu_custom_call.1} parent=35 // pred_check_branch
          %241 = sbr.rel (%p239) target = $region40
        $region39: #{tpu_custom_call.1} parent=35 // pred_region
          %242 = dma.done %s235, 128
        $region40: #{tpu_custom_call.1} parent=35 // pred_fallthru
          _
        %s243 = sand.u32 %s24, 1
        %s244 = scalar_lea.sflag [#allocation6], %s243
        %s245 = sand.u32 %s72, 1
        %s246 = smul.addr %s245, 2
        %s247 = scalar_lea.vmem [#allocation5], %s246
        // Predicated region
        $region41: #{tpu_custom_call.1} parent=35 // pred_check
          %p248 = pneg %p85
        $region42: #{tpu_custom_call.1} parent=35 // pred_check_branch
          %250 = sbr.rel (%p248) target = $region44
        $region43: #{tpu_custom_call.1} parent=35 // pred_region
          %251 = dma.done %s244, 32
        $region44: #{tpu_custom_call.1} parent=35 // pred_fallthru
          _
        // Predicated region
        $region45: #{tpu_custom_call.1} parent=35 // pred_check
          %p252 = pneg %p106
        $region46: #{tpu_custom_call.1} parent=35 // pred_check_branch
          %254 = sbr.rel (%p252) target = $region48
        $region47: #{tpu_custom_call.1} parent=35 // pred_region
          %255 = dma.done [#allocation6], 512
        $region48: #{tpu_custom_call.1} parent=35 // pred_fallthru
          _
        %s256 = sand.u32 %s46, 1
        %s257 = scalar_lea.sflag [#allocation3], %s256
        %s258 = sand.u32 %s46, 1
        %s259 = smul.addr %s258, 8
        %s260 = scalar_lea.vmem [#allocation2], %s259
        %p261 = pneg %p59
        %p262 = pneg %p56
        %s263 = sand.u32 %s24, 1
        %s264 = scalar_lea.sflag [#allocation6], %s263
        %s265 = sand.u32 %s72, 1
        %s266 = smul.addr %s265, 2
        %s267 = scalar_lea.vmem [#allocation5], %s266
        %p268 = pneg %p85
        %p269 = pneg %p82
        %p270 = pneg %p106
        %p271 = pneg %p103
        %p272 = pneg %p127
        %p273 = pneg %p124
        %p274 = pneg %p155
        %p275 = pneg %p152
        %s276 = sand.u32 %s142, 1
        %s277 = scalar_lea.sflag [#allocation4], %s276
        %s278 = sand.u32 %s142, 1
        %s279 = smul.addr %s278, 8
        %s280 = scalar_lea.vmem [#allocation8], %s279
        %v281 = vld [vmem:[%s238] sm:$0xff]
        %vm282 = vcmask 261120
        %v283 = vsel %vm282, %v281, 0.0
        %284 = vadd.xlane.f32.xlu0 %v283
        %v285 = vpop.xlane.xlu0 %284
        %v286 = vmul.f32 %v281, %v281
        %v287 = vsel %vm282, %v286, 0.0
        %288 = vadd.xlane.f32.xlu0 %v287
        %v289 = vpop.xlane.xlu0 %288
        %v290 = vmul.f32 %v285, 0.03125
        %v291 = vmul.f32 %v289, 0.03125
        %v292 = vmul.f32 %v290, %v290
        %v293 = vsub.f32 %v291, %v292
        %v294 = vmax.f32 %v293, 0.0
        %v295 = vsub.f32 %v281, %v290
        %v296 = vadd.f32 %v294, 1e-06
        %v297 = vrsqrt.pop %v296
        %v298 = vmul.f32 %v295, %v297
        %v299 = vld [vmem:[%s247] sm:$0x3]
        %v300 = vlaneseq
        %v301 = vshrl.u32 %v300, 7
        %v302 = vsub.s32 1, %v301
        %v303 = vrot.slane %v299, %v302
        %v304 = vmul.f32 %v298, %v303
        %v305 = vlaneseq
        %v306 = vshrl.u32 %v305, 7
        %v307 = vsub.s32 0, %v306
        %v308 = vrot.slane %v299, %v307
        %v309 = vadd.f32 %v304, %v308
        %v310 = vld [vmem:[#allocation7] sm:$0xff]
        %v311 = vld [vmem:[#allocation7 + $0x8] sm:$0xff]
        %v312 = vld [vmem:[#allocation7 + $0x10] sm:$0xff]
        %v313 = vld [vmem:[#allocation7 + $0x18] sm:$0xff]
        %v314 = vld [vmem:[%s3] sm:$0x1]
        %v316 = vlaneseq
        %v317 = vshrl.u32 %v316, 7
        %v318 = vsub.s32 0, %v317
        %v319 = vrot.slane %v314, %v318
        %v322 = vsel %vm282, %v309, 0
        %324 = vmatprep.subr.mxu0 0.0
        %325 = vmatpush1.msra.mxu0 0.0
        %326 = vmatprep.subr.mxu0 0.0
        %327 = vmatpush1.msra.mxu0 0.0
        %328 = vmatprep.subr.mxu0 0.0
        %329 = vmatpush1.msra.mxu0 0.0
        %330 = vmatprep.subr.mxu0 0.0
        %331 = vmatpush1.msra.mxu0 0.0
        %332 = vmatprep.subr.mxu0 0.0
        %333 = vmatpush1.msra.mxu0 0.0
        %334 = vmatprep.subr.mxu0 0.0
        %335 = vmatpush1.msra.mxu0 0.0
        %336 = vmatprep.subr.mxu0 0.0
        %337 = vmatpush1.msra.mxu0 0.0
        %338 = vmatprep.subr.mxu0 0.0
        %339 = vmatpush1.msra.mxu0 0.0
        %340 = vmatprep.subr.mxu0 0.0
        %341 = vmatpush1.msra.mxu0 0.0
        %342 = vmatprep.subr.mxu0 0.0
        %343 = vmatpush1.msra.mxu0 0.0
        %344 = vmatprep.subr.mxu0 0.0
        %345 = vmatpush1.msra.mxu0 0.0
        %346 = vmatprep.subr.mxu0 0.0
        %347 = vmatpush1.msra.mxu0 0.0
        %348 = vmatprep.subr.mxu0 0.0
        %349 = vmatpush1.msra.mxu0 %v313
        %350 = vmatprep.subr.mxu0 0.0
        %351 = vmatpush1.msra.mxu0 %v312
        %352 = vmatprep.subr.mxu0 0.0
        %353 = vmatpush1.msra.mxu0 %v311
        %354 = vmatprep.subr.mxu0 0.0
        %355 = vmatpush1.msra.mxu0 %v310
        %356 = vmatprep.subr.mxu0 0.0
        %357 = vmatpush2.msra.mxu0 0.0
        %358 = vmatprep.subr.mxu0 0.0
        %359 = vmatpush2.msra.mxu0 0.0
        %360 = vmatprep.subr.mxu0 0.0
        %361 = vmatpush2.msra.mxu0 0.0
        %362 = vmatprep.subr.mxu0 0.0
        %363 = vmatpush2.msra.mxu0 0.0
        %364 = vmatprep.subr.mxu0 0.0
        %365 = vmatpush2.msra.mxu0 0.0
        %366 = vmatprep.subr.mxu0 0.0
        %367 = vmatpush2.msra.mxu0 0.0
        %368 = vmatprep.subr.mxu0 0.0
        %369 = vmatpush2.msra.mxu0 0.0
        %370 = vmatprep.subr.mxu0 0.0
        %371 = vmatpush2.msra.mxu0 0.0
        %372 = vmatprep.subr.mxu0 0.0
        %373 = vmatpush2.msra.mxu0 0.0
        %374 = vmatprep.subr.mxu0 0.0
        %375 = vmatpush2.msra.mxu0 0.0
        %376 = vmatprep.subr.mxu0 0.0
        %377 = vmatpush2.msra.mxu0 0.0
        %378 = vmatprep.subr.mxu0 0.0
        %379 = vmatpush2.msra.mxu0 0.0
        %380 = vmatprep.subr.mxu0 0.0
        %381 = vmatpush2.msra.mxu0 0.0
        %382 = vmatprep.subr.mxu0 0.0
        %383 = vmatpush2.msra.mxu0 0.0
        %384 = vmatprep.subr.mxu0 0.0
        %385 = vmatpush2.msra.mxu0 0.0
        %386 = vmatprep.subr.mxu0 0.0
        %387 = vmatpush2.msra.mxu0 0.0
        %388 = vmatprep.mubr.f32.mxu0 0.0
        %389 = vmatmul.mubr.f32.gmra.mxu0 %v322
        %v390 = vpop.f32.mrf.mxu0
        %v391 = vadd.f32 %v319, %v390
        %v392 = vpop.f32.mrf.mxu0
        %393 = vdwg.mxu0
        %vm394 = vcmask 130048
        %395 = vst.msk [vmem:[%s280] sm:$0xff] %vm394, %v391
        %s396 = sand.u32 %s142, 1
        %s397 = scalar_lea.sflag [#allocation4], %s396
        %s398 = sand.u32 %s142, 1
        %s399 = smul.addr %s398, 8
        %s400 = scalar_lea.vmem [#allocation8], %s399
        // Predicated region
        $region49: #{tpu_custom_call.1} parent=35 // pred_check
          %p401 = pneg %p152
        $region50: #{tpu_custom_call.1} parent=35 // pred_check_branch
          %403 = sbr.rel (%p401) target = $region52
        $region51: #{tpu_custom_call.1} parent=35 // pred_region
          %s405 = ssub.s32 128, 128
          %406 = vsyncadd %s397, %s405
          %s407 = sadd.s32 %s29, %s28
          %s408 = smul.addr %s407, 128
          %s409 = scalar_lea.hbm %s4, %s408
          %s411 = sshll.u32 %s400, 4
          %s412 = int_to_ptr.vmem [resolvable:$true] %s411
          %414 = dma.vmem_to_hbm [thread:$0]  %s412, 128, %s409, %s397
        $region52: #{tpu_custom_call.1} parent=35 // pred_fallthru
          _
      $region36: #{tpu_custom_call.1} parent=5 // pred_fallthru
        _
      %p415 = scmp.le.s32.totalorder 2, %s19
      // Predicated region
      $region53: #{tpu_custom_call.1} parent=5 // pred_check
        %p416 = pneg %p415
      $region54: #{tpu_custom_call.1} parent=5 // pred_check_branch
        %418 = sbr.rel (%p416) target = $region56
      $region55: #{tpu_custom_call.1} parent=5 // pred_region
        %s419 = ssub.s32 %s19, 2
        // Predicated region
        $region57: #{tpu_custom_call.1} parent=55 // pred_check
          %p420 = pneg %p158
        $region58: #{tpu_custom_call.1} parent=55 // pred_check_branch
          %422 = sbr.rel (%p420) target = $region60
        $region59: #{tpu_custom_call.1} parent=55 // pred_region
          %s423 = sand.u32 %s143, 1
          %s424 = scalar_lea.sflag [#allocation4], %s423
          %s425 = sand.u32 %s143, 1
          %s426 = smul.addr %s425, 8
          %s427 = scalar_lea.vmem [#allocation8], %s426
          %428 = dma.done %s424, 128
        $region60: #{tpu_custom_call.1} parent=55 // pred_fallthru
          _
      $region56: #{tpu_custom_call.1} parent=5 // pred_fallthru
        _
    $region6: #{tpu_custom_call.1} parent=1 // loop_footer
      %s23 = sadd.s32 1, %s19
    $region7: #{tpu_custom_call.1} parent=1 // loop_footer_branch
      %18 = sbr.rel target = $region3
    $region8: #{tpu_custom_call.1} parent=1 // loop_exit
      _
    %429 = vsyncpa [#allocation3], 1
    %s430 = scalar_lea.sflag [#allocation3], 1
    %431 = vsyncpa %s430, 1
    %432 = vsyncpa [#allocation6], 1
    %s433 = scalar_lea.sflag [#allocation6], 1
    %434 = vsyncpa %s433, 1
    %435 = vsyncpa [#allocation4], 1
    %s436 = scalar_lea.sflag [#allocation4], 1
    %437 = vsyncpa %s436, 1

</llo_original>
